<compile_context>
chip_gen: v7x
topology: tpu7x:2x2x1
jax: 0.10.0
libtpu: 0.0.40
codegen_flags: <defaults>
</compile_context>

<pallas_src>
import jax
import jax.numpy as jnp
from jax import lax
from jax.experimental import pallas as pl
from jax.experimental.pallas import tpu as pltpu


def _round_up(x, m):
    return (x + m - 1) // m * m


def _round_down(x, m):
    return x // m * m


# ---------------------------------------------------------------------------
# Gather path: per-row HBM DMA straight into the pipelined output block.
# ---------------------------------------------------------------------------
def _embedding_gather_kernel(ids_ref, table_ref, out_ref, sem):
    # ids_ref:   SMEM (padded_tokens,) int32   (scalar prefetch)
    # table_ref: HBM  (V, D)                   (memory_space=pl.ANY, unpadded)
    # out_ref:   VMEM (TB, D)                  (pipelined output block)
    # sem:       one DMA semaphore shared by every row copy of this tile
    tb = out_ref.shape[0]
    t0 = pl.program_id(0) * tb

    def issue(i, carry):
        row = ids_ref[t0 + i]
        pltpu.make_async_copy(
            table_ref.at[pl.ds(row, 1), :],   # (1, D) source row in HBM
            out_ref.at[pl.ds(i, 1), :],       # (1, D) destination row in VMEM
            sem,
        ).start()
        return carry

    # Unrolled so the LLO scheduler can pack address math + descriptor pushes
    # and keep many DMAs outstanding (descriptor issue is the scalar-bound
    # phase of a gather).
    lax.fori_loop(0, tb, issue, 0, unroll=8)

    # Single size-matched wait.  DMA semaphores are incremented by bytes
    # copied; the tb row copies above total exactly one (TB, D) slab, so one
    # wait whose descriptor covers the full output block retires all of them.
    # NOTE: this coupling requires every row copy to be full width D — do not
    # switch to partial-width row copies without also changing this wait.
    pltpu.make_async_copy(out_ref, out_ref, sem).wait()


# ---------------------------------------------------------------------------
# Small-table path: one-hot matmul on the MXU, full (padded) table in VMEM.
# ---------------------------------------------------------------------------
def _embedding_onehot_kernel(ids_ref, table_ref, out_ref):
    # ids_ref: (TB, 1) int32; table_ref: (V_pad, D_pad); out_ref: (TB, D_pad)
    tb = ids_ref.shape[0]
    v = table_ref.shape[0]
    ids = ids_ref[...]                                         # (TB, 1)
    vocab_iota = lax.broadcasted_iota(jnp.int32, (tb, v), 1)   # (TB, V_pad)
    # 0/1 one-hot is exact in any dtype; matching the table dtype keeps the
    # MXU at the table's rate without changing the selected rows.
    one_hot = (ids == vocab_iota).astype(table_ref.dtype)
    out_ref[...] = jnp.dot(
        one_hot, table_ref[...], preferred_element_type=jnp.float32
    ).astype(out_ref.dtype)


# ---------------------------------------------------------------------------
# Wrapper
# ---------------------------------------------------------------------------
def embedding_lookup(
    ids,
    table,
    *,
    token_block=256,
    onehot_table_bytes=4 * 1024 * 1024,   # table byte budget for the MXU path
    vmem_budget_bytes=16 * 1024 * 1024,   # double-buffered output blocks (v7x safe)
):
    """ids: integer array of any shape; table: (vocab_size, embed_dim)."""
    orig_shape = ids.shape
    vocab_size, embed_dim = table.shape
    itemsize = jnp.dtype(table.dtype).itemsize

    # PyTorch nn.Embedding raises on out-of-range ids; a kernel cannot raise,
    # so clamp instead — this also guarantees the HBM row DMA is never OOB.
    ids_flat = jnp.clip(ids.reshape(-1).astype(jnp.int32), 0, vocab_size - 1)
    num_tokens = int(ids_flat.shape[0])

    # Route by table *byte* size: small tables go to the VMEM-resident one-hot
    # MXU path (per-token DMA descriptor cost would dominate there).
    use_onehot = vocab_size * embed_dim * itemsize <= onehot_table_bytes

    # Token tile: multiple of 8, as large as useful (<= token_block).
    tb = max(8, min(token_block, _round_up(num_tokens, 8)))
    if not use_onehot:
        # Cap so the two pipelined output buffers stay within the VMEM budget
        # (v7x: 64 MiB physical, 32 MiB default scoped limit).
        max_tb = max(8, _round_down(vmem_budget_bytes // (2 * embed_dim * itemsize), 8))
        tb = min(tb, max_tb)
    # Prefer >= 2 grid steps so v7x's two TensorCores both get work on the
    # "parallel" axis (halve tb rather than letting the grid collapse to 1).
    while tb >= num_tokens and tb > 8:
        tb = max(8, _round_down(tb // 2, 8))

    padded_tokens = _round_up(num_tokens, tb)
    if padded_tokens != num_tokens:
        ids_flat = jnp.pad(ids_flat, (0, padded_tokens - num_tokens))

    grid = (padded_tokens // tb,)

    if use_onehot:
        # Small table: pad (cheap, few MiB at most) so the MXU tiles are
        # lane/sublane aligned and the output store is lane-dense.
        v_pad = _round_up(vocab_size, 8)
        d_pad = _round_up(embed_dim, 128)
        table_p = table
        if (v_pad, d_pad) != (vocab_size, embed_dim):
            table_p = jnp.pad(
                table, ((0, v_pad - vocab_size), (0, d_pad - embed_dim))
            )
        ids_col = ids_flat.reshape(padded_tokens, 1)
        out = pl.pallas_call(
            _embedding_onehot_kernel,
            out_shape=jax.ShapeDtypeStruct((padded_tokens, d_pad), table.dtype),
            grid_spec=pltpu.PrefetchScalarGridSpec(
                num_scalar_prefetch=0,
                grid=grid,
                in_specs=[
                    pl.BlockSpec((tb, 1), lambda i: (i, 0)),         # ids tile
                    pl.BlockSpec((v_pad, d_pad), lambda i: (0, 0)),  # full table
                ],
                out_specs=pl.BlockSpec((tb, d_pad), lambda i: (i, 0)),
            ),
            compiler_params=pltpu.CompilerParams(
                dimension_semantics=("parallel",)),
        )(ids_col, table_p)
    else:
        # Large table: pure HBM DMA gather — table never padded, never copied,
        # never enters VMEM except the rows actually requested.
        out = pl.pallas_call(
            _embedding_gather_kernel,
            out_shape=jax.ShapeDtypeStruct((padded_tokens, embed_dim), table.dtype),
            grid_spec=pltpu.PrefetchScalarGridSpec(
                num_scalar_prefetch=1,                               # ids -> SMEM
                grid=grid,
                in_specs=[pl.BlockSpec(memory_space=pl.ANY)],        # table in HBM
                out_specs=pl.BlockSpec((tb, embed_dim), lambda i, ids: (i, 0)),
                scratch_shapes=[
                    pltpu.SemaphoreType.DMA,                         # shared DMA sem
                ],
            ),
            compiler_params=pltpu.CompilerParams(
                dimension_semantics=("parallel",)),
        )(ids_flat, table)
        # TODO(synk): if descriptor issue is still exposed on v7x, add a
        # 2-slot VMEM gather scratch and software-pipeline row DMAs across
        # tiles (ids are already all in SMEM).

    out = out[:num_tokens, :embed_dim]
    return out.reshape(*orig_shape, embed_dim)


if __name__ == "__main__":
    key = jax.random.PRNGKey(0)
    k1, k2, k3, k4, k5, k6 = jax.random.split(key, 6)
    batch, seq = 2, 8

    # Config 1: 8 MiB table -> HBM row-DMA gather path.
    vocab1, dim1 = 4096, 512
    table1 = jax.random.normal(k1, (vocab1, dim1), dtype=jnp.float32)
    x1 = jax.random.randint(k2, (batch, seq), 0, vocab1, dtype=jnp.int32)
    out1 = jax.block_until_ready(embedding_lookup(x1, table1))
    ref1 = jnp.take(table1, x1, axis=0)
    assert out1.shape == (batch, seq, dim1)
    assert jnp.allclose(out1, ref1, atol=1e-6), "gather path mismatch vs reference"

    # Config 2: 2 MiB table -> byte-based routing sends it to the one-hot
    # MXU path (previously misrouted to the descriptor-bound gather path).
    vocab2, dim2 = 2048, 256
    table2 = jax.random.normal(k3, (vocab2, dim2), dtype=jnp.float32)
    x2 = jax.random.randint(k4, (batch, seq), 0, vocab2, dtype=jnp.int32)
    out2 = jax.block_until_ready(embedding_lookup(x2, table2))
    ref2 = jnp.take(table2, x2, axis=0)
    assert out2.shape == (batch, seq, dim2)
    assert jnp.allclose(out2, ref2, atol=1e-6), "one-hot path mismatch vs reference"

    # Config 3: tiny module-scale table (32, 32) — one-hot path with internal
    # lane padding of embed_dim to 128.
    vocab3, dim3 = 32, 32
    table3 = jax.random.normal(k5, (vocab3, dim3), dtype=jnp.float32)
    x3 = jax.random.randint(k6, (batch, seq), 0, vocab3, dtype=jnp.int32)
    out3 = jax.block_until_ready(embedding_lookup(x3, table3))
    ref3 = jnp.take(table3, x3, axis=0)
    assert out3.shape == (batch, seq, dim3)
    assert jnp.allclose(out3, ref3, atol=1e-6), "tiny-vocab path mismatch vs reference"

    print("KERNEL_OK")
</pallas_src>

<mosaic_0001>
module attributes {stable_mosaic.version = 11 : i64} {
  func.func @_embedding_gather_kernel(%arg0: i32, %arg1: memref<16xi32, #tpu.memory_space<smem>>, %arg2: memref<4096x512xf32, #tpu.memory_space<any>>, %arg3: memref<8x512xf32, #tpu.memory_space<vmem>>, %arg4: memref<!tpu.dma_semaphore, #tpu.memory_space<semaphore_mem>>) attributes {dimension_semantics = [#tpu.dimension_semantics<parallel>], iteration_bounds = array<i64: 2>, scalar_prefetch = 1 : i64, scratch_operands = 1 : i64, tpu.core_type = #tpu.core_type<tc>, window_params = [{}, {transform_indices = @transform_1, window_bounds = array<i64: 8, 512>}]} {
    %c8_i32 = arith.constant 8 : i32
    %0 = arith.muli %arg0, %c8_i32 : i32
    %c0_i32 = arith.constant 0 : i32
    %1 = arith.addi %0, %c0_i32 : i32
    %2 = arith.index_cast %1 : i32 to index
    %3 = memref.load %arg1[%2] : memref<16xi32, #tpu.memory_space<smem>>
    %c0_i32_0 = arith.constant 0 : i32
    %4 = tpu.memref_slice %arg2[%3, %c0_i32_0] : memref<4096x512xf32, #tpu.memory_space<any>> -> memref<1x512xf32, #tpu.memory_space<any>>
    %c0_i32_1 = arith.constant 0 : i32
    %5 = tpu.memref_slice %arg3[%c0_i32, %c0_i32_1] : memref<8x512xf32, #tpu.memory_space<vmem>> -> memref<1x512xf32, #tpu.memory_space<vmem>>
    tpu.enqueue_dma source(%4 : memref<1x512xf32, #tpu.memory_space<any>>) target(%5 : memref<1x512xf32, #tpu.memory_space<vmem>>) target_semaphore(%arg4 : memref<!tpu.dma_semaphore, #tpu.memory_space<semaphore_mem>>)
    %c1_i32 = arith.constant 1 : i32
    %6 = arith.addi %0, %c1_i32 : i32
    %7 = arith.index_cast %6 : i32 to index
    %8 = memref.load %arg1[%7] : memref<16xi32, #tpu.memory_space<smem>>
    %c0_i32_2 = arith.constant 0 : i32
    %9 = tpu.memref_slice %arg2[%8, %c0_i32_2] : memref<4096x512xf32, #tpu.memory_space<any>> -> memref<1x512xf32, #tpu.memory_space<any>>
    %c0_i32_3 = arith.constant 0 : i32
    %10 = tpu.memref_slice %arg3[%c1_i32, %c0_i32_3] : memref<8x512xf32, #tpu.memory_space<vmem>> -> memref<1x512xf32, #tpu.memory_space<vmem>>
    tpu.enqueue_dma source(%9 : memref<1x512xf32, #tpu.memory_space<any>>) target(%10 : memref<1x512xf32, #tpu.memory_space<vmem>>) target_semaphore(%arg4 : memref<!tpu.dma_semaphore, #tpu.memory_space<semaphore_mem>>)
    %c2_i32 = arith.constant 2 : i32
    %11 = arith.addi %0, %c2_i32 : i32
    %12 = arith.index_cast %11 : i32 to index
    %13 = memref.load %arg1[%12] : memref<16xi32, #tpu.memory_space<smem>>
    %c0_i32_4 = arith.constant 0 : i32
    %14 = tpu.memref_slice %arg2[%13, %c0_i32_4] : memref<4096x512xf32, #tpu.memory_space<any>> -> memref<1x512xf32, #tpu.memory_space<any>>
    %c0_i32_5 = arith.constant 0 : i32
    %15 = tpu.memref_slice %arg3[%c2_i32, %c0_i32_5] : memref<8x512xf32, #tpu.memory_space<vmem>> -> memref<1x512xf32, #tpu.memory_space<vmem>>
    tpu.enqueue_dma source(%14 : memref<1x512xf32, #tpu.memory_space<any>>) target(%15 : memref<1x512xf32, #tpu.memory_space<vmem>>) target_semaphore(%arg4 : memref<!tpu.dma_semaphore, #tpu.memory_space<semaphore_mem>>)
    %c3_i32 = arith.constant 3 : i32
    %16 = arith.addi %0, %c3_i32 : i32
    %17 = arith.index_cast %16 : i32 to index
    %18 = memref.load %arg1[%17] : memref<16xi32, #tpu.memory_space<smem>>
    %c0_i32_6 = arith.constant 0 : i32
    %19 = tpu.memref_slice %arg2[%18, %c0_i32_6] : memref<4096x512xf32, #tpu.memory_space<any>> -> memref<1x512xf32, #tpu.memory_space<any>>
    %c0_i32_7 = arith.constant 0 : i32
    %20 = tpu.memref_slice %arg3[%c3_i32, %c0_i32_7] : memref<8x512xf32, #tpu.memory_space<vmem>> -> memref<1x512xf32, #tpu.memory_space<vmem>>
    tpu.enqueue_dma source(%19 : memref<1x512xf32, #tpu.memory_space<any>>) target(%20 : memref<1x512xf32, #tpu.memory_space<vmem>>) target_semaphore(%arg4 : memref<!tpu.dma_semaphore, #tpu.memory_space<semaphore_mem>>)
    %c4_i32 = arith.constant 4 : i32
    %21 = arith.addi %0, %c4_i32 : i32
    %22 = arith.index_cast %21 : i32 to index
    %23 = memref.load %arg1[%22] : memref<16xi32, #tpu.memory_space<smem>>
    %c0_i32_8 = arith.constant 0 : i32
    %24 = tpu.memref_slice %arg2[%23, %c0_i32_8] : memref<4096x512xf32, #tpu.memory_space<any>> -> memref<1x512xf32, #tpu.memory_space<any>>
    %c0_i32_9 = arith.constant 0 : i32
    %25 = tpu.memref_slice %arg3[%c4_i32, %c0_i32_9] : memref<8x512xf32, #tpu.memory_space<vmem>> -> memref<1x512xf32, #tpu.memory_space<vmem>>
    tpu.enqueue_dma source(%24 : memref<1x512xf32, #tpu.memory_space<any>>) target(%25 : memref<1x512xf32, #tpu.memory_space<vmem>>) target_semaphore(%arg4 : memref<!tpu.dma_semaphore, #tpu.memory_space<semaphore_mem>>)
    %c5_i32 = arith.constant 5 : i32
    %26 = arith.addi %0, %c5_i32 : i32
    %27 = arith.index_cast %26 : i32 to index
    %28 = memref.load %arg1[%27] : memref<16xi32, #tpu.memory_space<smem>>
    %c0_i32_10 = arith.constant 0 : i32
    %29 = tpu.memref_slice %arg2[%28, %c0_i32_10] : memref<4096x512xf32, #tpu.memory_space<any>> -> memref<1x512xf32, #tpu.memory_space<any>>
    %c0_i32_11 = arith.constant 0 : i32
    %30 = tpu.memref_slice %arg3[%c5_i32, %c0_i32_11] : memref<8x512xf32, #tpu.memory_space<vmem>> -> memref<1x512xf32, #tpu.memory_space<vmem>>
    tpu.enqueue_dma source(%29 : memref<1x512xf32, #tpu.memory_space<any>>) target(%30 : memref<1x512xf32, #tpu.memory_space<vmem>>) target_semaphore(%arg4 : memref<!tpu.dma_semaphore, #tpu.memory_space<semaphore_mem>>)
    %c6_i32 = arith.constant 6 : i32
    %31 = arith.addi %0, %c6_i32 : i32
    %32 = arith.index_cast %31 : i32 to index
    %33 = memref.load %arg1[%32] : memref<16xi32, #tpu.memory_space<smem>>
    %c0_i32_12 = arith.constant 0 : i32
    %34 = tpu.memref_slice %arg2[%33, %c0_i32_12] : memref<4096x512xf32, #tpu.memory_space<any>> -> memref<1x512xf32, #tpu.memory_space<any>>
    %c0_i32_13 = arith.constant 0 : i32
    %35 = tpu.memref_slice %arg3[%c6_i32, %c0_i32_13] : memref<8x512xf32, #tpu.memory_space<vmem>> -> memref<1x512xf32, #tpu.memory_space<vmem>>
    tpu.enqueue_dma source(%34 : memref<1x512xf32, #tpu.memory_space<any>>) target(%35 : memref<1x512xf32, #tpu.memory_space<vmem>>) target_semaphore(%arg4 : memref<!tpu.dma_semaphore, #tpu.memory_space<semaphore_mem>>)
    %c7_i32 = arith.constant 7 : i32
    %36 = arith.addi %0, %c7_i32 : i32
    %37 = arith.index_cast %36 : i32 to index
    %38 = memref.load %arg1[%37] : memref<16xi32, #tpu.memory_space<smem>>
    %c0_i32_14 = arith.constant 0 : i32
    %39 = tpu.memref_slice %arg2[%38, %c0_i32_14] : memref<4096x512xf32, #tpu.memory_space<any>> -> memref<1x512xf32, #tpu.memory_space<any>>
    %c0_i32_15 = arith.constant 0 : i32
    %40 = tpu.memref_slice %arg3[%c7_i32, %c0_i32_15] : memref<8x512xf32, #tpu.memory_space<vmem>> -> memref<1x512xf32, #tpu.memory_space<vmem>>
    tpu.enqueue_dma source(%39 : memref<1x512xf32, #tpu.memory_space<any>>) target(%40 : memref<1x512xf32, #tpu.memory_space<vmem>>) target_semaphore(%arg4 : memref<!tpu.dma_semaphore, #tpu.memory_space<semaphore_mem>>)
    %c8_i32_16 = arith.constant 8 : i32
    tpu.wait_dma2 semaphore(%arg4 : memref<!tpu.dma_semaphore, #tpu.memory_space<semaphore_mem>>) src(%arg3 : memref<8x512xf32, #tpu.memory_space<vmem>>) dst(%arg3 : memref<8x512xf32, #tpu.memory_space<vmem>>)
    return
  }
  func.func @transform_1(%arg0: i32, %arg1: memref<16xi32, #tpu.memory_space<smem>>) -> (i32, i32) {
    %c0_i32 = arith.constant 0 : i32
    %c0_i32_0 = arith.constant 0 : i32
    return %arg0, %c0_i32 : i32, i32
  }
}

</mosaic_0001>

<llo_original>
// kernel: tpu_custom_call.1
$region0: #{tpu_custom_call.1}
  #allocation0 [shape = 'u32[]', space=smem, size = 0x4, offset = 0x4, fixed_abs, tag = 'smem constant byte address 0x4 - core index']
  #allocation1 [shape = 'u32[144,128]{1,0:T(1,128)}', space=vmem, size = 0x12000, scoped, tag = 'internal scratch']
  #allocation2 [shape = 's32[1]{0}', space=sflag, size = 0x4, scoped, tag = 'scratch operand']
  #allocation3 [shape = 's32[1]{0}', space=sflag, size = 0x4, scoped, tag = 'scoped memory for tpu_custom_call.1']
  #allocation4 [shape = 'u8[512]{0}', space=smem, size = 0x200, scoped, tag = 'prefetched SMEM operand 0']
  #allocation7 [shape = 's32[]', space=sflag, size = 0x4, offset = 0, fixed_abs, tag = 'sflag constant byte address 0x0 - dummy sync flag']
  #allocation8 [shape = 's32[]', space=sflag, size = 0x4, offset = 0, fixed_abs, tag = 'sflag constant byte address 0x0 - dummy sync flag']
  #allocation9 [shape = 's32[]', space=sflag, size = 0x4, offset = 0, fixed_abs, tag = 'sflag constant byte address 0x0 - dummy sync flag']
  #allocation10 [shape = 's32[]', space=sflag, size = 0x4, offset = 0, fixed_abs, tag = 'sflag constant byte address 0x0 - dummy sync flag']
  #allocation11 [shape = 's32[]', space=sflag, size = 0x4, offset = 0, fixed_abs, tag = 'sflag constant byte address 0x0 - dummy sync flag']
  #allocation12 [shape = 's32[]', space=sflag, size = 0x4, offset = 0, fixed_abs, tag = 'sflag constant byte address 0x0 - dummy sync flag']
  #allocation13 [shape = 's32[]', space=sflag, size = 0x4, offset = 0, fixed_abs, tag = 'sflag constant byte address 0x0 - dummy sync flag']
  #allocation14 [shape = 's32[]', space=sflag, size = 0x4, offset = 0, fixed_abs, tag = 'sflag constant byte address 0x0 - dummy sync flag']
  %s0 = inlined_call_operand.hbm [shape: s32[16], index: 0, kind: input, shape index: {}]
  %s1 = inlined_call_operand.hbm [shape: f32[4096,512], index: 1, kind: input, shape index: {}]
  %s2 = inlined_call_operand.hbm [shape: f32[16,512], index: 2, kind: output, shape index: {}]
  %s3 = sld [smem:[#allocation0]]
  $region25: #{tpu_custom_call.1} parent=0
    _
  %s5 = ssub.s32 1, %s3
  %s6 = scalar_select 0, %s5, %s3
  %8 = dma.hbm_to_smem %s0, 16, [#allocation4], [#allocation3]
  %9 = dma.done [#allocation3], 16
  %10 = sfence
  $region1: #{tpu_custom_call.1} parent=0
    #allocation5 [shape = 'u8[32768]{0}', space=vmem, size = 0x8000, scoped, tag = 'output window, operand 0']
    #allocation6 [shape = 's32[2]{0}', space=sflag, size = 0x8, scoped, tag = 'scoped memory for tpu_custom_call.1']
    %11 = vsyncpa [#allocation6], 0
    %s12 = scalar_lea.sflag [#allocation6], 1
    %13 = vsyncpa %s12, 0
    loop: start=0, step=1, limit=3
    $region2: #{tpu_custom_call.1} parent=1 // loop_pre_header
      _
    $region3: #{tpu_custom_call.1} parent=1 // loop_header
      %s15 = sphi 0, %s19
      %p16 = scmp.ge.s32.totalorder %s15, 3
      %s24 = sphi 0, %s26
      %s27 = sphi 0, %s24
      %s37 = sphi 0, %s27
    $region4: #{tpu_custom_call.1} parent=1 // loop_header_branch
      %18 = sbr.rel (%p16) target = $region8
    $region5: #{tpu_custom_call.1} parent=1 // loop_body
      %s20 = ssub.s32 %s15, 1
      %s21 = sadd.s32 %s15, 1
      %s22 = ssub.s32 %s15, %s21
      %p23 = scmp.eq.s32.totalorder %s22, 0
      %s25 = sadd.s32 %s24, 1
      %s26 = scalar_select %p23, %s24, %s25
      %p28 = pneg %p23
      %p29 = scmp.eq.s32.totalorder %s15, 1
      %p30 = por %p28, %p29
      %p31 = scmp.ne.s32.totalorder %s24, %s27
      %p32 = scmp.eq.s32.totalorder %s15, 0
      %p33 = por %p31, %p32
      %p34 = scmp.ne.s32.totalorder %s24, %s27
      %p35 = scmp.eq.s32.totalorder %s20, 1
      %p36 = por %p34, %p35
      %p38 = scmp.ne.s32.totalorder %s27, %s37
      %p39 = scmp.eq.s32.totalorder %s20, 0
      %p40 = por %p38, %p39
      %p41 = scmp.lt.s32.totalorder %s15, 2
      // Predicated region
      $region9: #{tpu_custom_call.1} parent=5 // pred_check
        %p42 = pneg %p41
      $region10: #{tpu_custom_call.1} parent=5 // pred_check_branch
        %44 = sbr.rel (%p42) target = $region12
      $region11: #{tpu_custom_call.1} parent=5 // pred_region
        %p45 = pneg %p33
        %p46 = pneg %p30
        %s47 = sand.u32 %s24, 1
        %s48 = scalar_lea.sflag [#allocation6], %s47
        %s49 = sand.u32 %s24, 1
        %s50 = smul.addr %s49, 32
        %s51 = scalar_lea.vmem [#allocation5], %s50
        %s52 = smul.u32 %s15, 8
        %s53 = sld [smem:[#allocation4 + %s52]]
        %s54 = sshrl.u32 %s53, 3
        %s55 = sand.u32 %s53, 7
        %s56 = smul.u32 %s54, 32
        %s57 = sadd.s32 %s55, %s56
        %s58 = smul.addr %s57, 16
        %s59 = scalar_lea.hbm %s1, %s58
        %s61 = sshll.u32 %s51, 4
        %s62 = int_to_ptr.vmem [resolvable:$true] %s61
        %64 = dma.hbm_to_vmem [thread:$0]  %s59, 64, %s62, [#allocation2], 128, 128, 1
        %s65 = sadd.s32 %s52, 1
        %s66 = sld [smem:[#allocation4 + %s65]]
        %s67 = sshrl.u32 %s66, 3
        %s68 = sand.u32 %s66, 7
        %s69 = smul.u32 %s67, 32
        %s70 = sadd.s32 %s68, %s69
        %s71 = smul.addr %s70, 16
        %s72 = scalar_lea.hbm %s1, %s71
        %s73 = scalar_lea.vmem %s51, 1 [#allocation5]
        %s75 = sshll.u32 %s73, 4
        %s76 = int_to_ptr.vmem [resolvable:$true] %s75
        %78 = dma.hbm_to_vmem [thread:$0]  %s72, 64, %s76, [#allocation2], 128, 128, 1
        %s79 = sadd.s32 %s52, 2
        %s80 = sld [smem:[#allocation4 + %s79]]
        %s81 = sshrl.u32 %s80, 3
        %s82 = sand.u32 %s80, 7
        %s83 = smul.u32 %s81, 32
        %s84 = sadd.s32 %s82, %s83
        %s85 = smul.addr %s84, 16
        %s86 = scalar_lea.hbm %s1, %s85
        %s87 = scalar_lea.vmem %s51, 2 [#allocation5]
        %s89 = sshll.u32 %s87, 4
        %s90 = int_to_ptr.vmem [resolvable:$true] %s89
        %92 = dma.hbm_to_vmem [thread:$0]  %s86, 64, %s90, [#allocation2], 128, 128, 1
        %s93 = sadd.s32 %s52, 3
        %s94 = sld [smem:[#allocation4 + %s93]]
        %s95 = sshrl.u32 %s94, 3
        %s96 = sand.u32 %s94, 7
        %s97 = smul.u32 %s95, 32
        %s98 = sadd.s32 %s96, %s97
        %s99 = smul.addr %s98, 16
        %s100 = scalar_lea.hbm %s1, %s99
        %s101 = scalar_lea.vmem %s51, 3 [#allocation5]
        %s103 = sshll.u32 %s101, 4
        %s104 = int_to_ptr.vmem [resolvable:$true] %s103
        %106 = dma.hbm_to_vmem [thread:$0]  %s100, 64, %s104, [#allocation2], 128, 128, 1
        %s107 = sadd.s32 %s52, 4
        %s108 = sld [smem:[#allocation4 + %s107]]
        %s109 = sshrl.u32 %s108, 3
        %s110 = sand.u32 %s108, 7
        %s111 = smul.u32 %s109, 32
        %s112 = sadd.s32 %s110, %s111
        %s113 = smul.addr %s112, 16
        %s114 = scalar_lea.hbm %s1, %s113
        %s115 = scalar_lea.vmem %s51, 4 [#allocation5]
        %s117 = sshll.u32 %s115, 4
        %s118 = int_to_ptr.vmem [resolvable:$true] %s117
        %120 = dma.hbm_to_vmem [thread:$0]  %s114, 64, %s118, [#allocation2], 128, 128, 1
        %s121 = sadd.s32 %s52, 5
        %s122 = sld [smem:[#allocation4 + %s121]]
        %s123 = sshrl.u32 %s122, 3
        %s124 = sand.u32 %s122, 7
        %s125 = smul.u32 %s123, 32
        %s126 = sadd.s32 %s124, %s125
        %s127 = smul.addr %s126, 16
        %s128 = scalar_lea.hbm %s1, %s127
        %s129 = scalar_lea.vmem %s51, 5 [#allocation5]
        %s131 = sshll.u32 %s129, 4
        %s132 = int_to_ptr.vmem [resolvable:$true] %s131
        %134 = dma.hbm_to_vmem [thread:$0]  %s128, 64, %s132, [#allocation2], 128, 128, 1
        %s135 = sadd.s32 %s52, 6
        %s136 = sld [smem:[#allocation4 + %s135]]
        %s137 = sshrl.u32 %s136, 3
        %s138 = sand.u32 %s136, 7
        %s139 = smul.u32 %s137, 32
        %s140 = sadd.s32 %s138, %s139
        %s141 = smul.addr %s140, 16
        %s142 = scalar_lea.hbm %s1, %s141
        %s143 = scalar_lea.vmem %s51, 6 [#allocation5]
        %s145 = sshll.u32 %s143, 4
        %s146 = int_to_ptr.vmem [resolvable:$true] %s145
        %148 = dma.hbm_to_vmem [thread:$0]  %s142, 64, %s146, [#allocation2], 128, 128, 1
        %s149 = sadd.s32 %s52, 7
        %s150 = sld [smem:[#allocation4 + %s149]]
        %s151 = sshrl.u32 %s150, 3
        %s152 = sand.u32 %s150, 7
        %s153 = smul.u32 %s151, 32
        %s154 = sadd.s32 %s152, %s153
        %s155 = smul.addr %s154, 16
        %s156 = scalar_lea.hbm %s1, %s155
        %s157 = scalar_lea.vmem %s51, 7 [#allocation5]
        %s159 = sshll.u32 %s157, 4
        %s160 = int_to_ptr.vmem [resolvable:$true] %s159
        %162 = dma.hbm_to_vmem [thread:$0]  %s156, 64, %s160, [#allocation2], 128, 128, 1
        %s163 = smul.u32 8, 1
        %s164 = smul.u32 %s163, 4
        %s165 = sshll.u32 %s164, 4
        %166 = dma.done [#allocation2], %s165
        %s167 = sand.u32 %s24, 1
        %s168 = scalar_lea.sflag [#allocation6], %s167
        %s169 = sand.u32 %s24, 1
        %s170 = smul.addr %s169, 32
        %s171 = scalar_lea.vmem [#allocation5], %s170
        // Predicated region
        $region13: #{tpu_custom_call.1} parent=11 // pred_check
          %p172 = pneg %p30
        $region14: #{tpu_custom_call.1} parent=11 // pred_check_branch
          %174 = sbr.rel (%p172) target = $region16
        $region15: #{tpu_custom_call.1} parent=11 // pred_region
          %s176 = ssub.s32 512, 512
          %177 = vsyncadd %s168, %s176
          %s178 = smul.addr %s15, 4
          %s179 = smul.addr %s178, 128
          %s180 = scalar_lea.hbm %s2, %s179
          %s182 = sshll.u32 %s171, 4
          %s183 = int_to_ptr.vmem [resolvable:$true] %s182
          %185 = dma.vmem_to_hbm [thread:$0]  %s183, 512, %s180, %s168
        $region16: #{tpu_custom_call.1} parent=11 // pred_fallthru
          _
      $region12: #{tpu_custom_call.1} parent=5 // pred_fallthru
        _
      %p186 = scmp.le.s32.totalorder 1, %s15
      // Predicated region
      $region17: #{tpu_custom_call.1} parent=5 // pred_check
        %p187 = pneg %p186
      $region18: #{tpu_custom_call.1} parent=5 // pred_check_branch
        %189 = sbr.rel (%p187) target = $region20
      $region19: #{tpu_custom_call.1} parent=5 // pred_region
        %s190 = ssub.s32 %s15, 1
        // Predicated region
        $region21: #{tpu_custom_call.1} parent=19 // pred_check
          %p191 = pneg %p36
        $region22: #{tpu_custom_call.1} parent=19 // pred_check_branch
          %193 = sbr.rel (%p191) target = $region24
        $region23: #{tpu_custom_call.1} parent=19 // pred_region
          %s194 = sand.u32 %s27, 1
          %s195 = scalar_lea.sflag [#allocation6], %s194
          %s196 = sand.u32 %s27, 1
          %s197 = smul.addr %s196, 32
          %s198 = scalar_lea.vmem [#allocation5], %s197
          %199 = dma.done %s195, 512
        $region24: #{tpu_custom_call.1} parent=19 // pred_fallthru
          _
      $region20: #{tpu_custom_call.1} parent=5 // pred_fallthru
        _
    $region6: #{tpu_custom_call.1} parent=1 // loop_footer
      %s19 = sadd.s32 1, %s15
    $region7: #{tpu_custom_call.1} parent=1 // loop_footer_branch
      %14 = sbr.rel target = $region3
    $region8: #{tpu_custom_call.1} parent=1 // loop_exit
      _
    %200 = vsyncpa [#allocation6], 1
    %s201 = scalar_lea.sflag [#allocation6], 1
    %202 = vsyncpa %s201, 1
  %203 = vsyncmov [#allocation2]
  %s204 = vpop.sfrf %203
  %p205 = scmp.eq.s32.totalorder %s204, 0
  %p206 = pneg %p205
  %208 = shalt.err (%p206)

</llo_original>
